<compile_context>
chip_gen: v7x
topology: tpu7x:2x2x1
jax: 0.10.0
libtpu: 0.0.40
codegen_flags: <defaults>
</compile_context>

<pallas_src>
import functools

import jax
import jax.numpy as jnp
from jax.experimental import pallas as pl
from jax.experimental.pallas import tpu as pltpu


def _head_classifier_kernel(dw_ref, db_ref, x_ref, o_ref):
    # dw_ref: SMEM (C_in,) f32   db_ref: SMEM (1,) f32
    # x_ref : VMEM (C_in, TS_SUB, LANE)    o_ref : VMEM (2, TS_SUB, LANE)
    c_in = x_ref.shape[0]

    # Full-width (TS_SUB, LANE) multiply-add contraction over channels.
    z = x_ref[0] * dw_ref[0]
    for c in range(1, c_in):
        z = z + x_ref[c] * dw_ref[c]
    z = z + db_ref[0]                                  # logit difference

    # Exact 2-class softmax: p1 = sigmoid(z), p0 = 1 - p1.
    # exp and reciprocal both issue on the EUP slot (hidden under the DMA).
    p1 = pl.reciprocal(1.0 + jnp.exp(-z), approx=False)
    p0 = 1.0 - p1

    o_ref[0] = p0.astype(o_ref.dtype)                  # full-width lane-dense stores
    o_ref[1] = p1.astype(o_ref.dtype)


@functools.partial(jax.jit, static_argnames=("tile_voxels",))
def head_classifier_forward(x, weight, bias, *, tile_voxels=131072):
    """x: (N, C_in, D, H, W) float32; weight: (2, C_in); bias: (2,)."""
    N, C_in, D, H, W = x.shape
    out_classes = weight.shape[0]
    assert out_classes == 2, "HeadClassifier has exactly 2 output classes"
    DHW = D * H * W

    # Logit-difference reformulation of the 2-class softmax.
    dw = (weight[1] - weight[0]).astype(jnp.float32)          # (C_in,)
    db = (bias[1] - bias[0]).reshape(1).astype(jnp.float32)   # (1,)

    # Pick a lane width that divides DHW (fed_ixi 48*60*48 divides 512).
    lane = None
    for cand in (512, 256, 128):
        if DHW % cand == 0:
            lane = cand
            break
    pad = 0
    if lane is None:
        lane = 128
        pad = (-DHW) % lane  # rare general-shape fallback: one extra input copy

    x3 = x.reshape(N, C_in, DHW)                              # free reshape
    if pad:
        x3 = jnp.pad(x3, ((0, 0), (0, 0), (0, pad)))
    DHW_p = DHW + pad
    R = DHW_p // lane
    x4 = x3.reshape(N, C_in, R, lane)                         # free reshape

    # Sublane-row tiling: ~tile_voxels voxels per block, rows multiple of 8
    # (or the full extent when R < 8).
    rows_per_block = min(max(1, tile_voxels // lane), R)
    if rows_per_block >= 8:
        rows_per_block = (rows_per_block // 8) * 8
    # v7x megacore: keep >= 2 grid blocks when N == 1 so both TCs get work.
    if N == 1 and rows_per_block >= R and R >= 16:
        half = -(-R // 2)
        rows_per_block = max(8, (half // 8) * 8)

    grid = (N, pl.cdiv(R, rows_per_block))

    cost = pl.CostEstimate(
        flops=N * DHW * (2 * C_in + 4),
        transcendentals=N * DHW * 2,
        bytes_accessed=N * DHW * (C_in + out_classes) * 4,
    )

    out4 = pl.pallas_call(
        _head_classifier_kernel,
        out_shape=jax.ShapeDtypeStruct((N, out_classes, R, lane), x.dtype),
        grid=grid,
        in_specs=[
            pl.BlockSpec(memory_space=pltpu.MemorySpace.SMEM),   # dw
            pl.BlockSpec(memory_space=pltpu.MemorySpace.SMEM),   # db
            pl.BlockSpec((None, C_in, rows_per_block, lane),
                         lambda n, s: (n, 0, s, 0)),
        ],
        out_specs=pl.BlockSpec((None, out_classes, rows_per_block, lane),
                               lambda n, s: (n, 0, s, 0)),
        compiler_params=pltpu.CompilerParams(
            dimension_semantics=("parallel", "parallel")),
        cost_estimate=cost,
    )(dw, db, x4)

    out3 = out4.reshape(N, out_classes, DHW_p)
    if pad:
        out3 = out3[:, :, :DHW]
    # Free reshape back: (N, 2, DHW) -> (N, 2, D, H, W).
    return out3.reshape(N, out_classes, D, H, W)


def _reference_forward(x, weight, bias):
    # Pure-JAX reference: 1x1x1 conv3d == einsum over channels, then softmax on dim 1.
    y = jnp.einsum("ncdhw,oc->nodhw", x, weight) + bias[None, :, None, None, None]
    return jax.nn.softmax(y, axis=1)


if __name__ == "__main__":
    # Module config: out_channels_first_layer=4 -> C_in = 8, out_classes = 2.
    out_channels_first_layer = 4
    C_in = 2 * out_channels_first_layer
    out_classes = 2

    # Small 3D input: N=2, C=8, D=16, H=16, W=18 -> DHW = 4608 voxels per sample
    # (divisible by 512, exercises a multi-row-block grid with a remainder block).
    N, D, H, W = 2, 16, 16, 18

    key = jax.random.PRNGKey(0)
    kx, kw, kb = jax.random.split(key, 3)

    x = jax.random.normal(kx, (N, C_in, D, H, W), dtype=jnp.float32)

    # Deterministic parameter init (PyTorch Conv3d default: uniform(-bound, bound),
    # bound = 1/sqrt(fan_in), fan_in = C_in * 1*1*1).
    bound = 1.0 / jnp.sqrt(jnp.float32(C_in))
    weight = jax.random.uniform(kw, (out_classes, C_in), jnp.float32, -bound, bound)
    bias = jax.random.uniform(kb, (out_classes,), jnp.float32, -bound, bound)

    out = head_classifier_forward(x, weight, bias)
    out = jax.block_until_ready(out)

    ref = _reference_forward(x, weight, bias)
    assert out.shape == (N, out_classes, D, H, W)
    assert jnp.allclose(out, ref, atol=1e-5, rtol=1e-5), "mismatch vs reference"
    # Softmax sanity: channel probabilities sum to 1.
    assert jnp.allclose(jnp.sum(out, axis=1), 1.0, atol=1e-5)

    print("KERNEL_OK")
</pallas_src>

<mosaic_0001>
module attributes {stable_mosaic.version = 11 : i64} {
  func.func @_head_classifier_kernel(%arg0: i32, %arg1: i32, %arg2: memref<8xf32, #tpu.memory_space<smem>>, %arg3: memref<1xf32, #tpu.memory_space<smem>>, %arg4: memref<1x8x8x512xf32, #tpu.memory_space<vmem>>, %arg5: memref<1x2x8x512xf32, #tpu.memory_space<vmem>>) attributes {dimension_semantics = [#tpu.dimension_semantics<parallel>, #tpu.dimension_semantics<parallel>], iteration_bounds = array<i64: 2, 2>, scalar_prefetch = 0 : i64, scratch_operands = 0 : i64, tpu.core_type = #tpu.core_type<tc>, window_params = [{transform_indices = @transform_0, window_bounds = array<i64: 8>}, {transform_indices = @transform_1, window_bounds = array<i64: 1>}, {transform_indices = @transform_2, window_bounds = array<i64: 1, 8, 8, 512>}, {transform_indices = @transform_3, window_bounds = array<i64: 1, 2, 8, 512>}]} {
    %c0 = arith.constant 0 : index
    %c0_0 = arith.constant 0 : index
    %c0_1 = arith.constant 0 : index
    %c0_2 = arith.constant 0 : index
    %0 = vector.load %arg4[%c0, %c0_0, %c0_1, %c0_2] : memref<1x8x8x512xf32, #tpu.memory_space<vmem>>, vector<1x1x8x512xf32>
    %1 = vector.shape_cast %0 : vector<1x1x8x512xf32> to vector<8x512xf32>
    %c0_3 = arith.constant 0 : index
    %2 = memref.load %arg2[%c0_3] : memref<8xf32, #tpu.memory_space<smem>>
    %3 = vector.broadcast %2 : f32 to vector<8x512xf32>
    %4 = arith.mulf %1, %3 : vector<8x512xf32>
    %c0_4 = arith.constant 0 : index
    %c1 = arith.constant 1 : index
    %c0_5 = arith.constant 0 : index
    %c0_6 = arith.constant 0 : index
    %5 = vector.load %arg4[%c0_4, %c1, %c0_5, %c0_6] : memref<1x8x8x512xf32, #tpu.memory_space<vmem>>, vector<1x1x8x512xf32>
    %6 = vector.shape_cast %5 : vector<1x1x8x512xf32> to vector<8x512xf32>
    %c1_7 = arith.constant 1 : index
    %7 = memref.load %arg2[%c1_7] : memref<8xf32, #tpu.memory_space<smem>>
    %8 = vector.broadcast %7 : f32 to vector<8x512xf32>
    %9 = arith.mulf %6, %8 : vector<8x512xf32>
    %10 = arith.addf %4, %9 : vector<8x512xf32>
    %c0_8 = arith.constant 0 : index
    %c2 = arith.constant 2 : index
    %c0_9 = arith.constant 0 : index
    %c0_10 = arith.constant 0 : index
    %11 = vector.load %arg4[%c0_8, %c2, %c0_9, %c0_10] : memref<1x8x8x512xf32, #tpu.memory_space<vmem>>, vector<1x1x8x512xf32>
    %12 = vector.shape_cast %11 : vector<1x1x8x512xf32> to vector<8x512xf32>
    %c2_11 = arith.constant 2 : index
    %13 = memref.load %arg2[%c2_11] : memref<8xf32, #tpu.memory_space<smem>>
    %14 = vector.broadcast %13 : f32 to vector<8x512xf32>
    %15 = arith.mulf %12, %14 : vector<8x512xf32>
    %16 = arith.addf %10, %15 : vector<8x512xf32>
    %c0_12 = arith.constant 0 : index
    %c3 = arith.constant 3 : index
    %c0_13 = arith.constant 0 : index
    %c0_14 = arith.constant 0 : index
    %17 = vector.load %arg4[%c0_12, %c3, %c0_13, %c0_14] : memref<1x8x8x512xf32, #tpu.memory_space<vmem>>, vector<1x1x8x512xf32>
    %18 = vector.shape_cast %17 : vector<1x1x8x512xf32> to vector<8x512xf32>
    %c3_15 = arith.constant 3 : index
    %19 = memref.load %arg2[%c3_15] : memref<8xf32, #tpu.memory_space<smem>>
    %20 = vector.broadcast %19 : f32 to vector<8x512xf32>
    %21 = arith.mulf %18, %20 : vector<8x512xf32>
    %22 = arith.addf %16, %21 : vector<8x512xf32>
    %c0_16 = arith.constant 0 : index
    %c4 = arith.constant 4 : index
    %c0_17 = arith.constant 0 : index
    %c0_18 = arith.constant 0 : index
    %23 = vector.load %arg4[%c0_16, %c4, %c0_17, %c0_18] : memref<1x8x8x512xf32, #tpu.memory_space<vmem>>, vector<1x1x8x512xf32>
    %24 = vector.shape_cast %23 : vector<1x1x8x512xf32> to vector<8x512xf32>
    %c4_19 = arith.constant 4 : index
    %25 = memref.load %arg2[%c4_19] : memref<8xf32, #tpu.memory_space<smem>>
    %26 = vector.broadcast %25 : f32 to vector<8x512xf32>
    %27 = arith.mulf %24, %26 : vector<8x512xf32>
    %28 = arith.addf %22, %27 : vector<8x512xf32>
    %c0_20 = arith.constant 0 : index
    %c5 = arith.constant 5 : index
    %c0_21 = arith.constant 0 : index
    %c0_22 = arith.constant 0 : index
    %29 = vector.load %arg4[%c0_20, %c5, %c0_21, %c0_22] : memref<1x8x8x512xf32, #tpu.memory_space<vmem>>, vector<1x1x8x512xf32>
    %30 = vector.shape_cast %29 : vector<1x1x8x512xf32> to vector<8x512xf32>
    %c5_23 = arith.constant 5 : index
    %31 = memref.load %arg2[%c5_23] : memref<8xf32, #tpu.memory_space<smem>>
    %32 = vector.broadcast %31 : f32 to vector<8x512xf32>
    %33 = arith.mulf %30, %32 : vector<8x512xf32>
    %34 = arith.addf %28, %33 : vector<8x512xf32>
    %c0_24 = arith.constant 0 : index
    %c6 = arith.constant 6 : index
    %c0_25 = arith.constant 0 : index
    %c0_26 = arith.constant 0 : index
    %35 = vector.load %arg4[%c0_24, %c6, %c0_25, %c0_26] : memref<1x8x8x512xf32, #tpu.memory_space<vmem>>, vector<1x1x8x512xf32>
    %36 = vector.shape_cast %35 : vector<1x1x8x512xf32> to vector<8x512xf32>
    %c6_27 = arith.constant 6 : index
    %37 = memref.load %arg2[%c6_27] : memref<8xf32, #tpu.memory_space<smem>>
    %38 = vector.broadcast %37 : f32 to vector<8x512xf32>
    %39 = arith.mulf %36, %38 : vector<8x512xf32>
    %40 = arith.addf %34, %39 : vector<8x512xf32>
    %c0_28 = arith.constant 0 : index
    %c7 = arith.constant 7 : index
    %c0_29 = arith.constant 0 : index
    %c0_30 = arith.constant 0 : index
    %41 = vector.load %arg4[%c0_28, %c7, %c0_29, %c0_30] : memref<1x8x8x512xf32, #tpu.memory_space<vmem>>, vector<1x1x8x512xf32>
    %42 = vector.shape_cast %41 : vector<1x1x8x512xf32> to vector<8x512xf32>
    %c7_31 = arith.constant 7 : index
    %43 = memref.load %arg2[%c7_31] : memref<8xf32, #tpu.memory_space<smem>>
    %44 = vector.broadcast %43 : f32 to vector<8x512xf32>
    %45 = arith.mulf %42, %44 : vector<8x512xf32>
    %46 = arith.addf %40, %45 : vector<8x512xf32>
    %c0_32 = arith.constant 0 : index
    %47 = memref.load %arg3[%c0_32] : memref<1xf32, #tpu.memory_space<smem>>
    %48 = vector.broadcast %47 : f32 to vector<8x512xf32>
    %49 = arith.addf %46, %48 : vector<8x512xf32>
    %cst = arith.constant 0.000000e+00 : f32
    %50 = vector.broadcast %cst : f32 to vector<8x512xf32>
    %51 = arith.subf %50, %49 : vector<8x512xf32>
    %52 = math.exp %51 : vector<8x512xf32>
    %cst_33 = arith.constant 1.000000e+00 : f32
    %53 = vector.broadcast %cst_33 : f32 to vector<8x512xf32>
    %54 = arith.addf %53, %52 : vector<8x512xf32>
    %55 = tpu.reciprocal %54 : vector<8x512xf32> -> vector<8x512xf32>
    %cst_34 = arith.constant 1.000000e+00 : f32
    %56 = vector.broadcast %cst_34 : f32 to vector<8x512xf32>
    %57 = arith.subf %56, %55 : vector<8x512xf32>
    %c0_35 = arith.constant 0 : index
    %c0_36 = arith.constant 0 : index
    %c0_37 = arith.constant 0 : index
    %c0_38 = arith.constant 0 : index
    %58 = vector.load %arg5[%c0_35, %c0_36, %c0_37, %c0_38] : memref<1x2x8x512xf32, #tpu.memory_space<vmem>>, vector<1x1x8x512xf32>
    %59 = vector.shape_cast %58 : vector<1x1x8x512xf32> to vector<8x512xf32>
    %60 = vector.shape_cast %57 : vector<8x512xf32> to vector<1x1x8x512xf32>
    tpu.vector_store %arg5[%c0_35, %c0_36, %c0_37, %c0_38], %60 {strides = array<i32>} : memref<1x2x8x512xf32, #tpu.memory_space<vmem>>, vector<1x1x8x512xf32>,
    %c0_39 = arith.constant 0 : index
    %c1_40 = arith.constant 1 : index
    %c0_41 = arith.constant 0 : index
    %c0_42 = arith.constant 0 : index
    %61 = vector.load %arg5[%c0_39, %c1_40, %c0_41, %c0_42] : memref<1x2x8x512xf32, #tpu.memory_space<vmem>>, vector<1x1x8x512xf32>
    %62 = vector.shape_cast %61 : vector<1x1x8x512xf32> to vector<8x512xf32>
    %63 = vector.shape_cast %55 : vector<8x512xf32> to vector<1x1x8x512xf32>
    tpu.vector_store %arg5[%c0_39, %c1_40, %c0_41, %c0_42], %63 {strides = array<i32>} : memref<1x2x8x512xf32, #tpu.memory_space<vmem>>, vector<1x1x8x512xf32>,
    return
  }
  func.func @transform_0(%arg0: i32, %arg1: i32) -> i32 {
    %c0_i32 = arith.constant 0 : i32
    %c0_i32_0 = arith.constant 0 : i32
    return %c0_i32 : i32
  }
  func.func @transform_1(%arg0: i32, %arg1: i32) -> i32 {
    %c0_i32 = arith.constant 0 : i32
    %c0_i32_0 = arith.constant 0 : i32
    return %c0_i32 : i32
  }
  func.func @transform_2(%arg0: i32, %arg1: i32) -> (i32, i32, i32, i32) {
    %c0_i32 = arith.constant 0 : i32
    %c0_i32_0 = arith.constant 0 : i32
    %c0_i32_1 = arith.constant 0 : i32
    return %arg0, %c0_i32, %arg1, %c0_i32_0 : i32, i32, i32, i32
  }
  func.func @transform_3(%arg0: i32, %arg1: i32) -> (i32, i32, i32, i32) {
    %c0_i32 = arith.constant 0 : i32
    %c0_i32_0 = arith.constant 0 : i32
    %c0_i32_1 = arith.constant 0 : i32
    return %arg0, %c0_i32, %arg1, %c0_i32_0 : i32, i32, i32, i32
  }
}

</mosaic_0001>

<llo_original>
// kernel: head_classifier_forward.1
$region0: #{head_classifier_forward.1}
  #allocation0 [shape = 'u32[]', space=smem, size = 0x4, offset = 0x4, fixed_abs, tag = 'smem constant byte address 0x4 - core index']
  #allocation1 [shape = 'u32[144,128]{1,0:T(1,128)}', space=vmem, size = 0x12000, scoped, tag = 'internal scratch']
  #allocation2 [shape = 'f32[1]{0:T(128)S(6)}', space=smem, size = 0x200, scoped, tag = 'scoped memory for head_classifier_forward.1']
  %s0 = inlined_call_operand.vmem [shape: f32[8], index: 0, kind: input, shape index: {}]
  %s1 = inlined_call_operand.<no memory space> [shape: f32[1], index: 1, kind: input, shape index: {}]
  %s2 = inlined_call_operand.vmem [shape: f32[2,8,9,512], index: 2, kind: input, shape index: {}]
  %s3 = inlined_call_operand.vmem [shape: f32[2,2,9,512], index: 3, kind: output, shape index: {}]
  %s4 = sld [smem:[#allocation0]]
  $region91: #{head_classifier_forward.1} parent=0
    _
  %s6 = ssub.s32 1, %s4
  %s7 = scalar_select 0, %s6, %s4
  %8 = sst [smem:[#allocation2]] %s1
  $region1: #{head_classifier_forward.1} parent=0
    #allocation3 [shape = 'u8[512]{0}', space=smem, size = 0x200, scoped, tag = 'input window, operand 0, single buffered']
    #allocation4 [shape = 's32[2]{0}', space=sflag, size = 0x8, scoped, tag = 'scoped memory for head_classifier_forward.1']
    #allocation5 [shape = 'u8[262144]{0}', space=vmem, size = 0x40000, scoped, tag = 'input window, operand 2']
    #allocation6 [shape = 'u8[65536]{0}', space=vmem, size = 0x10000, scoped, tag = 'output window, operand 0']
    %9 = vsyncpa [#allocation4], 0
    loop: start=0, step=1, limit=6
    $region2: #{head_classifier_forward.1} parent=1 // loop_pre_header
      _
    $region3: #{head_classifier_forward.1} parent=1 // loop_header
      %s11 = sphi 0, %s15
      %p12 = scmp.ge.s32.totalorder %s11, 6
      %s18 = sphi 0, %s30
      %s19 = sphi 0, %s26
      %s20 = sphi 0, %s18
      %s21 = sphi 0, %s19
      %s22 = sphi 0, %s20
      %s23 = sphi 0, %s21
      %s31 = sphi 0, %s31
      %s33 = sphi 0, %s31
      %s34 = sphi 0, %s33
      %s48 = sphi 0, %s34
      %s52 = sphi 0, %s52
      %s54 = sphi 0, %s52
      %s55 = sphi 0, %s54
      %s69 = sphi 0, %s55
      %s77 = sphi 0, %s79
      %s80 = sphi 0, %s77
      %s81 = sphi 0, %s80
      %s97 = sphi 0, %s81
      %s105 = sphi 0, %s107
      %s108 = sphi 0, %s105
      %s109 = sphi 0, %s108
      %s125 = sphi 0, %s109
    $region4: #{head_classifier_forward.1} parent=1 // loop_header_branch
      %14 = sbr.rel (%p12) target = $region8
    $region5: #{head_classifier_forward.1} parent=1 // loop_body
      %s16 = ssub.s32 %s11, 1
      %s17 = ssub.s32 %s11, 2
      %s24 = sadd.s32 1, %s19
      %p25 = scmp.ge.s32.totalorder %s24, 2
      %s26 = scalar_select %p25, 0, %s24
      %s27 = sadd.s32 1, %s18
      %s28 = scalar_select %p25, %s27, %s18
      %p29 = scmp.ge.s32.totalorder %s28, 2
      %s30 = scalar_select %p29, 0, %s28
      %s32 = sadd.s32 %s31, 1
      %p35 = scmp.eq.s32.totalorder %s11, 3
      %p36 = scmp.ne.s32.totalorder %s31, %s33
      %p37 = scmp.eq.s32.totalorder %s11, 0
      %p38 = por %p36, %p37
      %p39 = scmp.ne.s32.totalorder %s31, %s33
      %p40 = scmp.eq.s32.totalorder %s16, 3
      %p41 = por %p39, %p40
      %p42 = scmp.ne.s32.totalorder %s33, %s34
      %p43 = scmp.eq.s32.totalorder %s16, 0
      %p44 = por %p42, %p43
      %p45 = scmp.ne.s32.totalorder %s33, %s34
      %p46 = scmp.eq.s32.totalorder %s17, 3
      %p47 = por %p45, %p46
      %p49 = scmp.ne.s32.totalorder %s34, %s48
      %p50 = scmp.eq.s32.totalorder %s17, 0
      %p51 = por %p49, %p50
      %s53 = sadd.s32 %s52, 1
      %p56 = scmp.eq.s32.totalorder %s11, 3
      %p57 = scmp.ne.s32.totalorder %s52, %s54
      %p58 = scmp.eq.s32.totalorder %s11, 0
      %p59 = por %p57, %p58
      %p60 = scmp.ne.s32.totalorder %s52, %s54
      %p61 = scmp.eq.s32.totalorder %s16, 3
      %p62 = por %p60, %p61
      %p63 = scmp.ne.s32.totalorder %s54, %s55
      %p64 = scmp.eq.s32.totalorder %s16, 0
      %p65 = por %p63, %p64
      %p66 = scmp.ne.s32.totalorder %s54, %s55
      %p67 = scmp.eq.s32.totalorder %s17, 3
      %p68 = por %p66, %p67
      %p70 = scmp.ne.s32.totalorder %s55, %s69
      %p71 = scmp.eq.s32.totalorder %s17, 0
      %p72 = por %p70, %p71
      %s73 = ssub.s32 %s18, %s30
      %s74 = ssub.s32 %s19, %s26
      %s75 = sor.u32 %s73, %s74
      %p76 = scmp.eq.s32.totalorder %s75, 0
      %s78 = sadd.s32 %s77, 1
      %s79 = scalar_select %p76, %s77, %s78
      %p82 = pneg %p76
      %p83 = scmp.eq.s32.totalorder %s11, 3
      %p84 = por %p82, %p83
      %p85 = scmp.ne.s32.totalorder %s77, %s80
      %p86 = scmp.eq.s32.totalorder %s11, 0
      %p87 = por %p85, %p86
      %p88 = scmp.ne.s32.totalorder %s77, %s80
      %p89 = scmp.eq.s32.totalorder %s16, 3
      %p90 = por %p88, %p89
      %p91 = scmp.ne.s32.totalorder %s80, %s81
      %p92 = scmp.eq.s32.totalorder %s16, 0
      %p93 = por %p91, %p92
      %p94 = scmp.ne.s32.totalorder %s80, %s81
      %p95 = scmp.eq.s32.totalorder %s17, 3
      %p96 = por %p94, %p95
      %p98 = scmp.ne.s32.totalorder %s81, %s97
      %p99 = scmp.eq.s32.totalorder %s17, 0
      %p100 = por %p98, %p99
      %s101 = ssub.s32 %s18, %s30
      %s102 = ssub.s32 %s19, %s26
      %s103 = sor.u32 %s101, %s102
      %p104 = scmp.eq.s32.totalorder %s103, 0
      %s106 = sadd.s32 %s105, 1
      %s107 = scalar_select %p104, %s105, %s106
      %p110 = pneg %p104
      %p111 = scmp.eq.s32.totalorder %s11, 3
      %p112 = por %p110, %p111
      %p113 = scmp.ne.s32.totalorder %s105, %s108
      %p114 = scmp.eq.s32.totalorder %s11, 0
      %p115 = por %p113, %p114
      %p116 = scmp.ne.s32.totalorder %s105, %s108
      %p117 = scmp.eq.s32.totalorder %s16, 3
      %p118 = por %p116, %p117
      %p119 = scmp.ne.s32.totalorder %s108, %s109
      %p120 = scmp.eq.s32.totalorder %s16, 0
      %p121 = por %p119, %p120
      %p122 = scmp.ne.s32.totalorder %s108, %s109
      %p123 = scmp.eq.s32.totalorder %s17, 3
      %p124 = por %p122, %p123
      %p126 = scmp.ne.s32.totalorder %s109, %s125
      %p127 = scmp.eq.s32.totalorder %s17, 0
      %p128 = por %p126, %p127
      %p129 = scmp.le.s32.totalorder 1, %s11
      %p130 = scmp.lt.s32.totalorder %s11, 5
      %p131 = pnand %p129, %p130
      %p132 = pneg %p131
      // Predicated region
      $region9: #{head_classifier_forward.1} parent=5 // pred_check
        _
      $region10: #{head_classifier_forward.1} parent=5 // pred_check_branch
        %134 = sbr.rel (%p131) target = $region12
      $region11: #{head_classifier_forward.1} parent=5 // pred_region
        %s135 = ssub.s32 %s11, 1
        // Predicated region
        $region13: #{head_classifier_forward.1} parent=11 // pred_check
          %p136 = pneg %p44
        $region14: #{head_classifier_forward.1} parent=11 // pred_check_branch
          %138 = sbr.rel (%p136) target = $region16
        $region15: #{head_classifier_forward.1} parent=11 // pred_region
          %s140 = ssub.s32 16, 16
          %141 = vsyncadd [#allocation4], %s140
          %s143 = sshll.u32 %s0, 4
          %s144 = int_to_ptr.vmem [resolvable:$true] %s143
          %146 = dma.vmem_to_smem %s144, 16, [#allocation3], [#allocation4]
        $region16: #{head_classifier_forward.1} parent=11 // pred_fallthru
          _
        // Predicated region
        $region17: #{head_classifier_forward.1} parent=11 // pred_check
          %p147 = pneg %p65
        $region18: #{head_classifier_forward.1} parent=11 // pred_check_branch
          %149 = sbr.rel (%p147) target = $region20
        $region19: #{head_classifier_forward.1} parent=11 // pred_region
          _
        $region20: #{head_classifier_forward.1} parent=11 // pred_fallthru
          _
      $region12: #{head_classifier_forward.1} parent=5 // pred_fallthru
        _
      %p150 = scmp.lt.s32.totalorder %s11, 4
      // Predicated region
      $region21: #{head_classifier_forward.1} parent=5 // pred_check
        %p151 = pneg %p150
      $region22: #{head_classifier_forward.1} parent=5 // pred_check_branch
        %153 = sbr.rel (%p151) target = $region24
      $region23: #{head_classifier_forward.1} parent=5 // pred_region
        // Predicated region
        $region25: #{head_classifier_forward.1} parent=23 // pred_check
          %p154 = pneg %p87
        $region26: #{head_classifier_forward.1} parent=23 // pred_check_branch
          %156 = sbr.rel (%p154) target = $region28
        $region27: #{head_classifier_forward.1} parent=23 // pred_region
          %s157 = sand.u32 %s77, 1
          %s158 = sand.u32 %s77, 1
          %s159 = smul.addr %s158, 256
          %s160 = scalar_lea.vmem [#allocation5], %s159
          %s161 = smul.addr %s19, 4
          %s162 = smul.addr %s18, 64
          %s163 = sadd.s32 %s161, %s162
          %s164 = smul.addr %s163, 8
          %s165 = scalar_lea.vmem %s2, %s164
          // Predicated region
          $region29: #{head_classifier_forward.1} parent=27 // pred_check
            _
          $region30: #{head_classifier_forward.1} parent=27 // pred_check_branch
            %167 = sbr.rel (0) target = $region32
          $region31: #{head_classifier_forward.1} parent=27 // pred_region
            // Predicated region
            $region33: #{head_classifier_forward.1} parent=31 // pred_check
              _
            $region34: #{head_classifier_forward.1} parent=31 // pred_check_branch
              %169 = sbr.rel (0) target = $region36
            $region35: #{head_classifier_forward.1} parent=31 // pred_region
              loop: start=0, step=1, limit=1
              $region37: #{head_classifier_forward.1} parent=35 // loop_pre_header
                _
              $region38: #{head_classifier_forward.1} parent=35 // loop_header
                %s171 = sphi 0, %s175
                %p172 = scmp.ge.s32.totalorder %s171, 1
                %s176 = sphi %s165, %s165
                %s177 = sphi %s160, %s160
              $region39: #{head_classifier_forward.1} parent=35 // loop_header_branch
                %174 = sbr.rel (%p172) target = $region43
              $region40: #{head_classifier_forward.1} parent=35 // loop_body
                %v178 = vld [vmem:[%s176] sm:$0xff]
                %179 = vst [vmem:[%s177] sm:$0xff] %v178
                %v180 = vld [vmem:[%s176 + $0x8] sm:$0xff]
                %181 = vst [vmem:[%s177 + $0x8] sm:$0xff] %v180
                %v182 = vld [vmem:[%s176 + $0x10] sm:$0xff]
                %183 = vst [vmem:[%s177 + $0x10] sm:$0xff] %v182
                %v184 = vld [vmem:[%s176 + $0x18] sm:$0xff]
                %185 = vst [vmem:[%s177 + $0x18] sm:$0xff] %v184
                %v186 = vld [vmem:[%s176 + $0x40] sm:$0xff]
                %187 = vst [vmem:[%s177 + $0x20] sm:$0xff] %v186
                %v188 = vld [vmem:[%s176 + $0x48] sm:$0xff]
                %189 = vst [vmem:[%s177 + $0x28] sm:$0xff] %v188
                %v190 = vld [vmem:[%s176 + $0x50] sm:$0xff]
                %191 = vst [vmem:[%s177 + $0x30] sm:$0xff] %v190
                %v192 = vld [vmem:[%s176 + $0x58] sm:$0xff]
                %193 = vst [vmem:[%s177 + $0x38] sm:$0xff] %v192
                %v194 = vld [vmem:[%s176 + $0x80] sm:$0xff]
                %195 = vst [vmem:[%s177 + $0x40] sm:$0xff] %v194
                %v196 = vld [vmem:[%s176 + $0x88] sm:$0xff]
                %197 = vst [vmem:[%s177 + $0x48] sm:$0xff] %v196
                %v198 = vld [vmem:[%s176 + $0x90] sm:$0xff]
                %199 = vst [vmem:[%s177 + $0x50] sm:$0xff] %v198
                %v200 = vld [vmem:[%s176 + $0x98] sm:$0xff]
                %201 = vst [vmem:[%s177 + $0x58] sm:$0xff] %v200
                %v202 = vld [vmem:[%s176 + $0xc0] sm:$0xff]
                %203 = vst [vmem:[%s177 + $0x60] sm:$0xff] %v202
                %v204 = vld [vmem:[%s176 + $0xc8] sm:$0xff]
                %205 = vst [vmem:[%s177 + $0x68] sm:$0xff] %v204
                %v206 = vld [vmem:[%s176 + $0xd0] sm:$0xff]
                %207 = vst [vmem:[%s177 + $0x70] sm:$0xff] %v206
                %v208 = vld [vmem:[%s176 + $0xd8] sm:$0xff]
                %209 = vst [vmem:[%s177 + $0x78] sm:$0xff] %v208
                %v210 = vld [vmem:[%s176 + $0x100] sm:$0xff]
                %211 = vst [vmem:[%s177 + $0x80] sm:$0xff] %v210
                %v212 = vld [vmem:[%s176 + $0x108] sm:$0xff]
                %213 = vst [vmem:[%s177 + $0x88] sm:$0xff] %v212
                %v214 = vld [vmem:[%s176 + $0x110] sm:$0xff]
                %215 = vst [vmem:[%s177 + $0x90] sm:$0xff] %v214
                %v216 = vld [vmem:[%s176 + $0x118] sm:$0xff]
                %217 = vst [vmem:[%s177 + $0x98] sm:$0xff] %v216
                %v218 = vld [vmem:[%s176 + $0x140] sm:$0xff]
                %219 = vst [vmem:[%s177 + $0xa0] sm:$0xff] %v218
                %v220 = vld [vmem:[%s176 + $0x148] sm:$0xff]
                %221 = vst [vmem:[%s177 + $0xa8] sm:$0xff] %v220
                %v222 = vld [vmem:[%s176 + $0x150] sm:$0xff]
                %223 = vst [vmem:[%s177 + $0xb0] sm:$0xff] %v222
                %v224 = vld [vmem:[%s176 + $0x158] sm:$0xff]
                %225 = vst [vmem:[%s177 + $0xb8] sm:$0xff] %v224
                %v226 = vld [vmem:[%s176 + $0x180] sm:$0xff]
                %227 = vst [vmem:[%s177 + $0xc0] sm:$0xff] %v226
                %v228 = vld [vmem:[%s176 + $0x188] sm:$0xff]
                %229 = vst [vmem:[%s177 + $0xc8] sm:$0xff] %v228
                %v230 = vld [vmem:[%s176 + $0x190] sm:$0xff]
                %231 = vst [vmem:[%s177 + $0xd0] sm:$0xff] %v230
                %v232 = vld [vmem:[%s176 + $0x198] sm:$0xff]
                %233 = vst [vmem:[%s177 + $0xd8] sm:$0xff] %v232
                %v234 = vld [vmem:[%s176 + $0x1c0] sm:$0xff]
                %235 = vst [vmem:[%s177 + $0xe0] sm:$0xff] %v234
                %v236 = vld [vmem:[%s176 + $0x1c8] sm:$0xff]
                %237 = vst [vmem:[%s177 + $0xe8] sm:$0xff] %v236
                %v238 = vld [vmem:[%s176 + $0x1d0] sm:$0xff]
                %239 = vst [vmem:[%s177 + $0xf0] sm:$0xff] %v238
                %v240 = vld [vmem:[%s176 + $0x1d8] sm:$0xff]
                %241 = vst [vmem:[%s177 + $0xf8] sm:$0xff] %v240
              $region41: #{head_classifier_forward.1} parent=35 // loop_footer
                %s175 = sadd.s32 1, %s171
              $region42: #{head_classifier_forward.1} parent=35 // loop_footer_branch
                %170 = sbr.rel target = $region38
              $region43: #{head_classifier_forward.1} parent=35 // loop_exit
                _
            $region36: #{head_classifier_forward.1} parent=31 // pred_fallthru
              _
            // Predicated region
            $region44: #{head_classifier_forward.1} parent=31 // pred_check
              _
            $region45: #{head_classifier_forward.1} parent=31 // pred_check_branch
              %243 = sbr.rel target = $region47
            $region46: #{head_classifier_forward.1} parent=31 // pred_region
              _
            $region47: #{head_classifier_forward.1} parent=31 // pred_fallthru
              _
          $region32: #{head_classifier_forward.1} parent=27 // pred_fallthru
            _
          %244 = vnop
        $region28: #{head_classifier_forward.1} parent=23 // pred_fallthru
          _
      $region24: #{head_classifier_forward.1} parent=5 // pred_fallthru
        _
      %p245 = scmp.le.s32.totalorder 1, %s11
      %p246 = scmp.lt.s32.totalorder %s11, 5
      %p247 = pnand %p245, %p246
      %p248 = pneg %p247
      // Predicated region
      $region48: #{head_classifier_forward.1} parent=5 // pred_check
        _
      $region49: #{head_classifier_forward.1} parent=5 // pred_check_branch
        %250 = sbr.rel (%p247) target = $region51
      $region50: #{head_classifier_forward.1} parent=5 // pred_region
        %s251 = ssub.s32 %s11, 1
        // Predicated region
        $region52: #{head_classifier_forward.1} parent=50 // pred_check
          %p252 = pneg %p44
        $region53: #{head_classifier_forward.1} parent=50 // pred_check_branch
          %254 = sbr.rel (%p252) target = $region55
        $region54: #{head_classifier_forward.1} parent=50 // pred_region
          %255 = dma.done [#allocation4], 16
        $region55: #{head_classifier_forward.1} parent=50 // pred_fallthru
          _
        %s256 = sand.u32 %s80, 1
        %s257 = sand.u32 %s80, 1
        %s258 = smul.addr %s257, 256
        %s259 = scalar_lea.vmem [#allocation5], %s258
        // Predicated region
        $region56: #{head_classifier_forward.1} parent=50 // pred_check
          %p260 = pneg %p93
        $region57: #{head_classifier_forward.1} parent=50 // pred_check_branch
          %262 = sbr.rel (%p260) target = $region59
        $region58: #{head_classifier_forward.1} parent=50 // pred_region
          _
        $region59: #{head_classifier_forward.1} parent=50 // pred_fallthru
          _
        %263 = sfence
        %p264 = pneg %p44
        %p265 = pneg %p41
        %p266 = pneg %p65
        %p267 = pneg %p62
        %s268 = sand.u32 %s80, 1
        %s269 = sand.u32 %s80, 1
        %s270 = smul.addr %s269, 256
        %s271 = scalar_lea.vmem [#allocation5], %s270
        %p272 = pneg %p93
        %p273 = pneg %p90
        %p274 = pneg %p121
        %p275 = pneg %p118
        %s276 = sand.u32 %s108, 1
        %s277 = sand.u32 %s108, 1
        %s278 = smul.addr %s277, 64
        %s279 = scalar_lea.vmem [#allocation6], %s278
        %v280 = vld [vmem:[%s259] sm:$0xff]
        %v281 = vld [vmem:[%s259 + $0x8] sm:$0xff]
        %v282 = vld [vmem:[%s259 + $0x10] sm:$0xff]
        %v283 = vld [vmem:[%s259 + $0x18] sm:$0xff]
        %s284 = sld [smem:[#allocation3]]
        %v285 = vstv %s284
        %v286 = vmul.f32 %v280, %v285
        %v287 = vmul.f32 %v281, %v285
        %v288 = vmul.f32 %v282, %v285
        %v289 = vmul.f32 %v283, %v285
        %s290 = scalar_lea.vmem %s259, 32 [#allocation5]
        %v291 = vld [vmem:[%s290] sm:$0xff]
        %v292 = vld [vmem:[%s290 + $0x8] sm:$0xff]
        %v293 = vld [vmem:[%s290 + $0x10] sm:$0xff]
        %v294 = vld [vmem:[%s290 + $0x18] sm:$0xff]
        %s295 = sld [smem:[#allocation3 + $0x1]]
        %v296 = vstv %s295
        %v297 = vmul.f32 %v291, %v296
        %v298 = vmul.f32 %v292, %v296
        %v299 = vmul.f32 %v293, %v296
        %v300 = vmul.f32 %v294, %v296
        %v301 = vadd.f32 %v286, %v297
        %v302 = vadd.f32 %v287, %v298
        %v303 = vadd.f32 %v288, %v299
        %v304 = vadd.f32 %v289, %v300
        %s305 = scalar_lea.vmem %s259, 64 [#allocation5]
        %v306 = vld [vmem:[%s305] sm:$0xff]
        %v307 = vld [vmem:[%s305 + $0x8] sm:$0xff]
        %v308 = vld [vmem:[%s305 + $0x10] sm:$0xff]
        %v309 = vld [vmem:[%s305 + $0x18] sm:$0xff]
        %s310 = sld [smem:[#allocation3 + $0x2]]
        %v311 = vstv %s310
        %v312 = vmul.f32 %v306, %v311
        %v313 = vmul.f32 %v307, %v311
        %v314 = vmul.f32 %v308, %v311
        %v315 = vmul.f32 %v309, %v311
        %v316 = vadd.f32 %v301, %v312
        %v317 = vadd.f32 %v302, %v313
        %v318 = vadd.f32 %v303, %v314
        %v319 = vadd.f32 %v304, %v315
        %s320 = scalar_lea.vmem %s259, 96 [#allocation5]
        %v321 = vld [vmem:[%s320] sm:$0xff]
        %v322 = vld [vmem:[%s320 + $0x8] sm:$0xff]
        %v323 = vld [vmem:[%s320 + $0x10] sm:$0xff]
        %v324 = vld [vmem:[%s320 + $0x18] sm:$0xff]
        %s325 = sld [smem:[#allocation3 + $0x3]]
        %v326 = vstv %s325
        %v327 = vmul.f32 %v321, %v326
        %v328 = vmul.f32 %v322, %v326
        %v329 = vmul.f32 %v323, %v326
        %v330 = vmul.f32 %v324, %v326
        %v331 = vadd.f32 %v316, %v327
        %v332 = vadd.f32 %v317, %v328
        %v333 = vadd.f32 %v318, %v329
        %v334 = vadd.f32 %v319, %v330
        %s335 = scalar_lea.vmem %s259, 128 [#allocation5]
        %v336 = vld [vmem:[%s335] sm:$0xff]
        %v337 = vld [vmem:[%s335 + $0x8] sm:$0xff]
        %v338 = vld [vmem:[%s335 + $0x10] sm:$0xff]
        %v339 = vld [vmem:[%s335 + $0x18] sm:$0xff]
        %s340 = sld [smem:[#allocation3 + $0x4]]
        %v341 = vstv %s340
        %v342 = vmul.f32 %v336, %v341
        %v343 = vmul.f32 %v337, %v341
        %v344 = vmul.f32 %v338, %v341
        %v345 = vmul.f32 %v339, %v341
        %v346 = vadd.f32 %v331, %v342
        %v347 = vadd.f32 %v332, %v343
        %v348 = vadd.f32 %v333, %v344
        %v349 = vadd.f32 %v334, %v345
        %s350 = scalar_lea.vmem %s259, 160 [#allocation5]
        %v351 = vld [vmem:[%s350] sm:$0xff]
        %v352 = vld [vmem:[%s350 + $0x8] sm:$0xff]
        %v353 = vld [vmem:[%s350 + $0x10] sm:$0xff]
        %v354 = vld [vmem:[%s350 + $0x18] sm:$0xff]
        %s355 = sld [smem:[#allocation3 + $0x5]]
        %v356 = vstv %s355
        %v357 = vmul.f32 %v351, %v356
        %v358 = vmul.f32 %v352, %v356
        %v359 = vmul.f32 %v353, %v356
        %v360 = vmul.f32 %v354, %v356
        %v361 = vadd.f32 %v346, %v357
        %v362 = vadd.f32 %v347, %v358
        %v363 = vadd.f32 %v348, %v359
        %v364 = vadd.f32 %v349, %v360
        %s365 = scalar_lea.vmem %s259, 192 [#allocation5]
        %v366 = vld [vmem:[%s365] sm:$0xff]
        %v367 = vld [vmem:[%s365 + $0x8] sm:$0xff]
        %v368 = vld [vmem:[%s365 + $0x10] sm:$0xff]
        %v369 = vld [vmem:[%s365 + $0x18] sm:$0xff]
        %s370 = sld [smem:[#allocation3 + $0x6]]
        %v371 = vstv %s370
        %v372 = vmul.f32 %v366, %v371
        %v373 = vmul.f32 %v367, %v371
        %v374 = vmul.f32 %v368, %v371
        %v375 = vmul.f32 %v369, %v371
        %v376 = vadd.f32 %v361, %v372
        %v377 = vadd.f32 %v362, %v373
        %v378 = vadd.f32 %v363, %v374
        %v379 = vadd.f32 %v364, %v375
        %s380 = scalar_lea.vmem %s259, 224 [#allocation5]
        %v381 = vld [vmem:[%s380] sm:$0xff]
        %v382 = vld [vmem:[%s380 + $0x8] sm:$0xff]
        %v383 = vld [vmem:[%s380 + $0x10] sm:$0xff]
        %v384 = vld [vmem:[%s380 + $0x18] sm:$0xff]
        %s385 = sld [smem:[#allocation3 + $0x7]]
        %v386 = vstv %s385
        %v387 = vmul.f32 %v381, %v386
        %v388 = vmul.f32 %v382, %v386
        %v389 = vmul.f32 %v383, %v386
        %v390 = vmul.f32 %v384, %v386
        %v391 = vadd.f32 %v376, %v387
        %v392 = vadd.f32 %v377, %v388
        %v393 = vadd.f32 %v378, %v389
        %v394 = vadd.f32 %v379, %v390
        %s395 = sld [smem:[#allocation2]]
        %v396 = vstv %s395
        %v397 = vadd.f32 %v391, %v396
        %v398 = vadd.f32 %v392, %v396
        %v399 = vadd.f32 %v393, %v396
        %v400 = vadd.f32 %v394, %v396
        %v401 = vsub.f32 0.0, %v397
        %v402 = vsub.f32 0.0, %v398
        %v403 = vsub.f32 0.0, %v399
        %v404 = vsub.f32 0.0, %v400
        %v405 = vmul.f32 %v401, 1.442695
        %v406 = vpow.pop %v405
        %v407 = vmul.f32 %v402, 1.442695
        %v408 = vpow.pop %v407
        %v409 = vmul.f32 %v403, 1.442695
        %v410 = vpow.pop %v409
        %v411 = vmul.f32 %v404, 1.442695
        %v412 = vpow.pop %v411
        %v413 = vadd.f32 %v406, 1.0
        %v414 = vadd.f32 %v408, 1.0
        %v415 = vadd.f32 %v410, 1.0
        %v416 = vadd.f32 %v412, 1.0
        %v417 = vrcp.pop %v413
        %v418 = vrcp.pop %v414
        %v419 = vrcp.pop %v415
        %v420 = vrcp.pop %v416
        %v421 = vsub.f32 1.0, %v417
        %v422 = vsub.f32 1.0, %v418
        %v423 = vsub.f32 1.0, %v419
        %v424 = vsub.f32 1.0, %v420
        %425 = vst [vmem:[%s279] sm:$0xff] %v421
        %426 = vst [vmem:[%s279 + $0x8] sm:$0xff] %v422
        %427 = vst [vmem:[%s279 + $0x10] sm:$0xff] %v423
        %428 = vst [vmem:[%s279 + $0x18] sm:$0xff] %v424
        %s429 = scalar_lea.vmem %s279, 32 [#allocation6]
        %430 = vst [vmem:[%s429] sm:$0xff] %v417
        %431 = vst [vmem:[%s429 + $0x8] sm:$0xff] %v418
        %432 = vst [vmem:[%s429 + $0x10] sm:$0xff] %v419
        %433 = vst [vmem:[%s429 + $0x18] sm:$0xff] %v420
        %s434 = sand.u32 %s108, 1
        %s435 = sand.u32 %s108, 1
        %s436 = smul.addr %s435, 64
        %s437 = scalar_lea.vmem [#allocation6], %s436
        // Predicated region
        $region60: #{head_classifier_forward.1} parent=50 // pred_check
          %p438 = pneg %p118
        $region61: #{head_classifier_forward.1} parent=50 // pred_check_branch
          %440 = sbr.rel (%p438) target = $region63
        $region62: #{head_classifier_forward.1} parent=50 // pred_region
          %s441 = smul.addr %s21, 4
          %s442 = smul.addr %s20, 16
          %s443 = sadd.s32 %s441, %s442
          %s444 = smul.addr %s443, 8
          %s445 = scalar_lea.vmem %s3, %s444
          // Predicated region
          $region64: #{head_classifier_forward.1} parent=62 // pred_check
            _
          $region65: #{head_classifier_forward.1} parent=62 // pred_check_branch
            %447 = sbr.rel (0) target = $region67
          $region66: #{head_classifier_forward.1} parent=62 // pred_region
            // Predicated region
            $region68: #{head_classifier_forward.1} parent=66 // pred_check
              _
            $region69: #{head_classifier_forward.1} parent=66 // pred_check_branch
              %449 = sbr.rel (0) target = $region71
            $region70: #{head_classifier_forward.1} parent=66 // pred_region
              loop: start=0, step=1, limit=1
              $region72: #{head_classifier_forward.1} parent=70 // loop_pre_header
                _
              $region73: #{head_classifier_forward.1} parent=70 // loop_header
                %s451 = sphi 0, %s455
                %p452 = scmp.ge.s32.totalorder %s451, 1
                %s456 = sphi %s437, %s437
                %s457 = sphi %s445, %s445
              $region74: #{head_classifier_forward.1} parent=70 // loop_header_branch
                %454 = sbr.rel (%p452) target = $region78
              $region75: #{head_classifier_forward.1} parent=70 // loop_body
                %v458 = vld [vmem:[%s456] sm:$0xff]
                %459 = vst [vmem:[%s457] sm:$0xff] %v458
                %v460 = vld [vmem:[%s456 + $0x8] sm:$0xff]
                %461 = vst [vmem:[%s457 + $0x8] sm:$0xff] %v460
                %v462 = vld [vmem:[%s456 + $0x10] sm:$0xff]
                %463 = vst [vmem:[%s457 + $0x10] sm:$0xff] %v462
                %v464 = vld [vmem:[%s456 + $0x18] sm:$0xff]
                %465 = vst [vmem:[%s457 + $0x18] sm:$0xff] %v464
                %v466 = vld [vmem:[%s456 + $0x20] sm:$0xff]
                %467 = vst [vmem:[%s457 + $0x40] sm:$0xff] %v466
                %v468 = vld [vmem:[%s456 + $0x28] sm:$0xff]
                %469 = vst [vmem:[%s457 + $0x48] sm:$0xff] %v468
                %v470 = vld [vmem:[%s456 + $0x30] sm:$0xff]
                %471 = vst [vmem:[%s457 + $0x50] sm:$0xff] %v470
                %v472 = vld [vmem:[%s456 + $0x38] sm:$0xff]
                %473 = vst [vmem:[%s457 + $0x58] sm:$0xff] %v472
              $region76: #{head_classifier_forward.1} parent=70 // loop_footer
                %s455 = sadd.s32 1, %s451
              $region77: #{head_classifier_forward.1} parent=70 // loop_footer_branch
                %450 = sbr.rel target = $region73
              $region78: #{head_classifier_forward.1} parent=70 // loop_exit
                _
            $region71: #{head_classifier_forward.1} parent=66 // pred_fallthru
              _
            // Predicated region
            $region79: #{head_classifier_forward.1} parent=66 // pred_check
              _
            $region80: #{head_classifier_forward.1} parent=66 // pred_check_branch
              %475 = sbr.rel target = $region82
            $region81: #{head_classifier_forward.1} parent=66 // pred_region
              _
            $region82: #{head_classifier_forward.1} parent=66 // pred_fallthru
              _
          $region67: #{head_classifier_forward.1} parent=62 // pred_fallthru
            _
          %476 = vnop
        $region63: #{head_classifier_forward.1} parent=50 // pred_fallthru
          _
      $region51: #{head_classifier_forward.1} parent=5 // pred_fallthru
        _
      %p477 = scmp.le.s32.totalorder 2, %s11
      // Predicated region
      $region83: #{head_classifier_forward.1} parent=5 // pred_check
        %p478 = pneg %p477
      $region84: #{head_classifier_forward.1} parent=5 // pred_check_branch
        %480 = sbr.rel (%p478) target = $region86
      $region85: #{head_classifier_forward.1} parent=5 // pred_region
        %s481 = ssub.s32 %s11, 2
        // Predicated region
        $region87: #{head_classifier_forward.1} parent=85 // pred_check
          %p482 = pneg %p124
        $region88: #{head_classifier_forward.1} parent=85 // pred_check_branch
          %484 = sbr.rel (%p482) target = $region90
        $region89: #{head_classifier_forward.1} parent=85 // pred_region
          %s485 = sand.u32 %s109, 1
          %s486 = sand.u32 %s109, 1
          %s487 = smul.addr %s486, 64
          %s488 = scalar_lea.vmem [#allocation6], %s487
        $region90: #{head_classifier_forward.1} parent=85 // pred_fallthru
          _
      $region86: #{head_classifier_forward.1} parent=5 // pred_fallthru
        _
    $region6: #{head_classifier_forward.1} parent=1 // loop_footer
      %s15 = sadd.s32 1, %s11
    $region7: #{head_classifier_forward.1} parent=1 // loop_footer_branch
      %10 = sbr.rel target = $region3
    $region8: #{head_classifier_forward.1} parent=1 // loop_exit
      _
    %489 = vsyncpa [#allocation4], 1
    %s490 = scalar_lea.sflag [#allocation4], 1
    %491 = vsyncpa %s490, 1

</llo_original>
